<compile_context>
chip_gen: v5e
topology: v5e:2x2
jax: 0.10.0
libtpu: 0.0.40
codegen_flags: <defaults>
</compile_context>

<pallas_src>
import math
from functools import partial

import jax
import jax.numpy as jnp
from jax.experimental import pallas as pl
from jax.experimental.pallas import tpu as pltpu

LANE = 128        # lane width / padded feature dim
SUBLANE = 8       # sublane granularity / padded batch granularity
NUM_LAYERS = 4    # 3 hidden linears + output linear
CARRIER = LANE - 1  # constant-1 carrier lane (must be >= every real feature dim)


# ----------------------------- Pallas kernel -------------------------------


def _mapping_network_kernel(z_ref, w_ref, out_ref):
    """Fused MappingNetwork MLP with biases folded into the weight slab.

    z_ref:   (Bp, 128)      f32  padded input; lane 127 == 1.0 (carrier)
    w_ref:   (4*128, 128)   bf16 packed weights; row 127 of each tile = bias
    out_ref: (Bp, 128)      f32  padded output
    """

    def leaky_relu(x):
        return jnp.where(x > 0, x, 0.2 * x)

    h = z_ref[...]  # f32 activations
    # three hidden layers (static slices of the packed slab -> aligned views)
    for i in range(3):
        w = w_ref[i * LANE:(i + 1) * LANE, :]  # bf16, fed to MXU directly
        h = leaky_relu(jnp.dot(h.astype(jnp.bfloat16), w,
                               preferred_element_type=jnp.float32))
    # output layer (bias folded in, no activation)
    wo = w_ref[3 * LANE:4 * LANE, :]
    out_ref[...] = jnp.dot(h.astype(jnp.bfloat16), wo,
                           preferred_element_type=jnp.float32)


@partial(jax.jit, static_argnames=("z_dim", "out_dim"))
def _mapping_network_jit(z, w_slab, *, z_dim, out_dim):
    batch = z.shape[0]
    bp = ((batch + SUBLANE - 1) // SUBLANE) * SUBLANE  # sublane-aligned batch

    # lane-dense padded input with constant-1 carrier in lane 127
    # (concat + pad fuse into one small fusion under jit)
    z_row = jnp.concatenate(
        [z.astype(jnp.float32),
         jnp.zeros((batch, LANE - z_dim - 1), jnp.float32),
         jnp.ones((batch, 1), jnp.float32)],
        axis=1)                                     # (batch, 128)
    z_pad = jnp.pad(z_row, ((0, bp - batch), (0, 0)))  # (bp, 128)

    flops = 2 * bp * LANE * LANE * NUM_LAYERS
    bytes_accessed = z_pad.size * 4 + w_slab.size * 2 + bp * LANE * 4

    vmem = pl.BlockSpec(memory_space=pltpu.MemorySpace.VMEM)
    out_pad = pl.pallas_call(
        _mapping_network_kernel,
        out_shape=jax.ShapeDtypeStruct((bp, LANE), jnp.float32),
        in_specs=[vmem, vmem],
        out_specs=vmem,
        cost_estimate=pl.CostEstimate(
            flops=flops, transcendentals=0, bytes_accessed=bytes_accessed),
    )(z_pad, w_slab)

    return out_pad[:batch, :out_dim]


def mapping_network_pallas(z, packed):
    """Runs the MappingNetwork forward pass as a single Pallas call."""
    return _mapping_network_jit(z, packed["w"],
                                z_dim=packed["z_dim"], out_dim=packed["out_dim"])


# ------------------------- parameter initialization ------------------------


def kaiming_leaky_weight(key, fan_in, fan_out, a=0.2):
    # kaiming_normal_(mode='fan_in', nonlinearity='leaky_relu', a=0.2)
    gain = math.sqrt(2.0 / (1.0 + a * a))
    std = gain / math.sqrt(fan_in)
    # stored as (in, out) for x @ W layout (== PyTorch x @ W.T with W (out, in))
    return std * jax.random.normal(key, (fan_in, fan_out), dtype=jnp.float32)


def default_linear_weight(key, fan_in, fan_out):
    # PyTorch default Linear weight init: U(-1/sqrt(fan_in), 1/sqrt(fan_in))
    bound = 1.0 / math.sqrt(fan_in)
    return jax.random.uniform(key, (fan_in, fan_out), jnp.float32, -bound, bound)


def default_linear_bias(key, fan_in, fan_out):
    bound = 1.0 / math.sqrt(fan_in)
    return jax.random.uniform(key, (fan_out,), jnp.float32, -bound, bound)


def init_generator_params(key, z_dim, map_hidden_dim, map_output_dim):
    """Mirrors MappingNetwork.__init__ with hidden=2 (skips=[])."""
    ks = jax.random.split(key, 8)
    w0 = kaiming_leaky_weight(ks[0], z_dim, map_hidden_dim)
    b0 = default_linear_bias(ks[1], z_dim, map_hidden_dim)
    w1 = kaiming_leaky_weight(ks[2], map_hidden_dim, map_hidden_dim)
    b1 = default_linear_bias(ks[3], map_hidden_dim, map_hidden_dim)
    w2 = kaiming_leaky_weight(ks[4], map_hidden_dim, map_hidden_dim)
    b2 = default_linear_bias(ks[5], map_hidden_dim, map_hidden_dim)
    # output layer: default init, then weight *= 0.25 (as in __init__)
    wo = 0.25 * default_linear_weight(ks[6], map_hidden_dim, map_output_dim)
    bo = default_linear_bias(ks[7], map_hidden_dim, map_output_dim)
    return ((w0, b0), (w1, b1), (w2, b2), (wo, bo))


def pack_params(params, z_dim, map_hidden_dim, map_output_dim):
    """Packs weights+biases into ONE lane-dense bf16 slab (bias-as-row trick)."""
    (w0, b0), (w1, b1), (w2, b2), (wo, bo) = params
    # carrier lane must sit above every real feature dim so it never leaks
    assert z_dim < CARRIER and map_hidden_dim < CARRIER and map_output_dim < CARRIER

    layer_defs = [
        (w0, b0, z_dim, map_hidden_dim),
        (w1, b1, map_hidden_dim, map_hidden_dim),
        (w2, b2, map_hidden_dim, map_hidden_dim),
        (wo, bo, map_hidden_dim, map_output_dim),
    ]
    w_slab = jnp.zeros((NUM_LAYERS * LANE, LANE), jnp.float32)
    for i, (w, b, din, dout) in enumerate(layer_defs):
        r = i * LANE
        w_slab = w_slab.at[r:r + din, :dout].set(w)      # real weights
        w_slab = w_slab.at[r + CARRIER, :dout].set(b)    # bias folded as row
        w_slab = w_slab.at[r + CARRIER, CARRIER].set(1.0)  # carrier survives layer
    # bf16 storage: half the DMA bytes; exact zeros / 1.0 stay exact
    w_slab = w_slab.astype(jnp.bfloat16)

    return {"w": w_slab, "z_dim": z_dim, "out_dim": map_output_dim}


# ------------------------------ Generator ----------------------------------


def generator_forward(arcface, packed, regress=True, decode_verts=False):
    """Generator.forward: (prediction, shape)."""
    if regress:
        shape = mapping_network_pallas(arcface, packed)
    else:
        shape = arcface
    prediction = None
    if decode_verts:
        # TODO(synk): FLAME decoding not implemented (instantiate_flame=False path)
        raise NotImplementedError("FLAME decoding not implemented")
    return prediction, shape


# ----------------------------- reference check ------------------------------


def mapping_network_ref(z, params):
    """Pure-JAX reference replicating the kernel's numerics:
    bf16 activations/weights at each dot (f32 accumulate), bf16-rounded biases,
    f32 bias add and leaky_relu."""

    def bf(x):
        return x.astype(jnp.bfloat16)

    def lrelu(x):
        return jnp.where(x > 0, x, 0.2 * x)

    (w0, b0), (w1, b1), (w2, b2), (wo, bo) = params
    h = z.astype(jnp.float32)
    for w, b in ((w0, b0), (w1, b1), (w2, b2)):
        h = lrelu(jnp.dot(bf(h), bf(w), preferred_element_type=jnp.float32)
                  + bf(b).astype(jnp.float32))
    return (jnp.dot(bf(h), bf(wo), preferred_element_type=jnp.float32)
            + bf(bo).astype(jnp.float32))


if __name__ == "__main__":
    key = jax.random.PRNGKey(0)
    k_param, k_in = jax.random.split(key)

    # Small, module-consistent shapes: arcface embedding z_dim=32,
    # map_hidden_dim=64, map_output_dim=48 (FLAME shape params), batch=2.
    batch, z_dim, map_hidden_dim, map_output_dim = 2, 32, 64, 48

    params = init_generator_params(k_param, z_dim, map_hidden_dim, map_output_dim)
    packed = pack_params(params, z_dim, map_hidden_dim, map_output_dim)
    arcface = jax.random.normal(k_in, (batch, z_dim), dtype=jnp.float32)

    prediction, shape = generator_forward(arcface, packed,
                                          regress=True, decode_verts=False)
    shape = jax.block_until_ready(shape)

    # sanity check against a pure-JAX reference with matching numerics
    ref = mapping_network_ref(arcface, params)
    assert shape.shape == (batch, map_output_dim)
    assert prediction is None
    assert jnp.allclose(shape, ref, atol=1e-3, rtol=1e-3), (
        float(jnp.max(jnp.abs(shape - ref))))

    print("KERNEL_OK")
</pallas_src>

<mosaic_0001>
module attributes {stable_mosaic.version = 11 : i64} {
  func.func @_mapping_network_kernel(%arg0: memref<8x128xf32, #tpu.memory_space<vmem>>, %arg1: memref<512x128xbf16, #tpu.memory_space<vmem>>, %arg2: memref<8x128xf32, #tpu.memory_space<vmem>>) attributes {dimension_semantics = [], scalar_prefetch = 0 : i64, scratch_operands = 0 : i64, tpu.core_type = #tpu.core_type<tc>} {
    %c0 = arith.constant 0 : index
    %c0_0 = arith.constant 0 : index
    %0 = vector.load %arg0[%c0, %c0_0] : memref<8x128xf32, #tpu.memory_space<vmem>>, vector<8x128xf32>
    %c0_1 = arith.constant 0 : index
    %c0_2 = arith.constant 0 : index
    %1 = vector.load %arg1[%c0_1, %c0_2] : memref<512x128xbf16, #tpu.memory_space<vmem>>, vector<128x128xbf16>
    %2 = arith.truncf %0 : vector<8x128xf32> to vector<8x128xbf16>
    %cst = arith.constant dense<0.000000e+00> : vector<8x128xf32>
    %3 = tpu.matmul %2, %1, %cst {dimension_numbers = #tpu.dot_dimension_numbers<[1], [0], [0], [1], [0, 0, 1, 1], [], []>} : vector<8x128xbf16>, vector<128x128xbf16>, vector<8x128xf32> -> vector<8x128xf32>
    %cst_3 = arith.constant 0.000000e+00 : f32
    %4 = vector.broadcast %cst_3 : f32 to vector<8x128xf32>
    %5 = arith.cmpf ogt, %3, %4 : vector<8x128xf32>
    %cst_4 = arith.constant 2.000000e-01 : f32
    %6 = vector.broadcast %cst_4 : f32 to vector<8x128xf32>
    %7 = arith.mulf %6, %3 : vector<8x128xf32>
    %8 = arith.select %5, %3, %7 : vector<8x128xi1>, vector<8x128xf32>
    %c128 = arith.constant 128 : index
    %c0_5 = arith.constant 0 : index
    %9 = vector.load %arg1[%c128, %c0_5] : memref<512x128xbf16, #tpu.memory_space<vmem>>, vector<128x128xbf16>
    %10 = arith.truncf %8 : vector<8x128xf32> to vector<8x128xbf16>
    %cst_6 = arith.constant dense<0.000000e+00> : vector<8x128xf32>
    %11 = tpu.matmul %10, %9, %cst_6 {dimension_numbers = #tpu.dot_dimension_numbers<[1], [0], [0], [1], [0, 0, 1, 1], [], []>} : vector<8x128xbf16>, vector<128x128xbf16>, vector<8x128xf32> -> vector<8x128xf32>
    %cst_7 = arith.constant 0.000000e+00 : f32
    %12 = vector.broadcast %cst_7 : f32 to vector<8x128xf32>
    %13 = arith.cmpf ogt, %11, %12 : vector<8x128xf32>
    %cst_8 = arith.constant 2.000000e-01 : f32
    %14 = vector.broadcast %cst_8 : f32 to vector<8x128xf32>
    %15 = arith.mulf %14, %11 : vector<8x128xf32>
    %16 = arith.select %13, %11, %15 : vector<8x128xi1>, vector<8x128xf32>
    %c256 = arith.constant 256 : index
    %c0_9 = arith.constant 0 : index
    %17 = vector.load %arg1[%c256, %c0_9] : memref<512x128xbf16, #tpu.memory_space<vmem>>, vector<128x128xbf16>
    %18 = arith.truncf %16 : vector<8x128xf32> to vector<8x128xbf16>
    %cst_10 = arith.constant dense<0.000000e+00> : vector<8x128xf32>
    %19 = tpu.matmul %18, %17, %cst_10 {dimension_numbers = #tpu.dot_dimension_numbers<[1], [0], [0], [1], [0, 0, 1, 1], [], []>} : vector<8x128xbf16>, vector<128x128xbf16>, vector<8x128xf32> -> vector<8x128xf32>
    %cst_11 = arith.constant 0.000000e+00 : f32
    %20 = vector.broadcast %cst_11 : f32 to vector<8x128xf32>
    %21 = arith.cmpf ogt, %19, %20 : vector<8x128xf32>
    %cst_12 = arith.constant 2.000000e-01 : f32
    %22 = vector.broadcast %cst_12 : f32 to vector<8x128xf32>
    %23 = arith.mulf %22, %19 : vector<8x128xf32>
    %24 = arith.select %21, %19, %23 : vector<8x128xi1>, vector<8x128xf32>
    %c384 = arith.constant 384 : index
    %c0_13 = arith.constant 0 : index
    %25 = vector.load %arg1[%c384, %c0_13] : memref<512x128xbf16, #tpu.memory_space<vmem>>, vector<128x128xbf16>
    %26 = arith.truncf %24 : vector<8x128xf32> to vector<8x128xbf16>
    %cst_14 = arith.constant dense<0.000000e+00> : vector<8x128xf32>
    %27 = tpu.matmul %26, %25, %cst_14 {dimension_numbers = #tpu.dot_dimension_numbers<[1], [0], [0], [1], [0, 0, 1, 1], [], []>} : vector<8x128xbf16>, vector<128x128xbf16>, vector<8x128xf32> -> vector<8x128xf32>
    %c0_15 = arith.constant 0 : index
    %c0_16 = arith.constant 0 : index
    %28 = vector.load %arg2[%c0_15, %c0_16] : memref<8x128xf32, #tpu.memory_space<vmem>>, vector<8x128xf32>
    tpu.vector_store %arg2[%c0_15, %c0_16], %27 {strides = array<i32>} : memref<8x128xf32, #tpu.memory_space<vmem>>, vector<8x128xf32>,
    return
  }
}

</mosaic_0001>

<llo_original>
// kernel: _mapping_network_jit.1
$region0: #{_mapping_network_jit.1}
  #allocation0 [shape = 'u32[]', space=smem, size = 0x4, offset = 0x4, fixed_abs, tag = 'smem constant byte address 0x4 - core index']
  #allocation1 [shape = 'u32[72,128]{1,0:T(1,128)}', space=vmem, size = 0x9000, scoped, tag = 'internal scratch']
  %s0 = inlined_call_operand.vmem [shape: f32[8,128], index: 0, kind: input, shape index: {}]
  %s1 = inlined_call_operand.hbm [shape: bf16[512,128], index: 1, kind: input, shape index: {}]
  %s2 = inlined_call_operand.vmem [shape: f32[8,128], index: 2, kind: output, shape index: {}]
  %s3 = sld [smem:[#allocation0]]
  $region22: #{_mapping_network_jit.1} parent=0
    _
  %s5 = ssub.s32 1, %s3
  %s6 = scalar_select 0, %s5, %s3
  $region1: #{_mapping_network_jit.1} parent=0
    #allocation2 [shape = 'u8[131072]{0}', space=vmem, size = 0x20000, scoped, tag = 'input window, operand 1, single buffered']
    #allocation3 [shape = 's32[1]{0}', space=sflag, size = 0x4, scoped, tag = 'scoped memory for _mapping_network_jit.1']
    %7 = vsyncpa [#allocation3], 0
    // Predicated region
    $region2: #{_mapping_network_jit.1} parent=1 // pred_check
      _
    $region3: #{_mapping_network_jit.1} parent=1 // pred_check_branch
      %9 = sbr.rel (0) target = $region5
    $region4: #{_mapping_network_jit.1} parent=1 // pred_region
      _
    $region5: #{_mapping_network_jit.1} parent=1 // pred_fallthru
      _
    // Predicated region
    $region6: #{_mapping_network_jit.1} parent=1 // pred_check
      _
    $region7: #{_mapping_network_jit.1} parent=1 // pred_check_branch
      %11 = sbr.rel (0) target = $region9
    $region8: #{_mapping_network_jit.1} parent=1 // pred_region
      %13 = vsyncadd [#allocation3], 0
      %s14 = sshll.u32 %s1, 4
      %s15 = int_to_ptr.hbm [resolvable:$true] %s14
      %s16 = sshll.u32 [#allocation2], 4
      %s17 = int_to_ptr.vmem [resolvable:$true] %s16
      %22 = dma.hbm_to_vmem [thread:$0]  %s15, 4096, %s17, [#allocation3], 64, 64, 4
    $region9: #{_mapping_network_jit.1} parent=1 // pred_fallthru
      _
    // Predicated region
    $region10: #{_mapping_network_jit.1} parent=1 // pred_check
      _
    $region11: #{_mapping_network_jit.1} parent=1 // pred_check_branch
      %24 = sbr.rel (0) target = $region13
    $region12: #{_mapping_network_jit.1} parent=1 // pred_region
      %26 = dma.done [#allocation3], 4096
    $region13: #{_mapping_network_jit.1} parent=1 // pred_fallthru
      _
    %v27 = vld [vmem:[%s0] sm:$0xff]
    %v28 = vld [vmem:[#allocation2] sm:$0xf]
    %v29 = vld [vmem:[#allocation2 + $0x4] sm:$0xf]
    %v30 = vld [vmem:[#allocation2 + $0x8] sm:$0xf]
    %v31 = vld [vmem:[#allocation2 + $0xc] sm:$0xf]
    %v32 = vld [vmem:[#allocation2 + $0x10] sm:$0xf]
    %v33 = vld [vmem:[#allocation2 + $0x14] sm:$0xf]
    %v34 = vld [vmem:[#allocation2 + $0x18] sm:$0xf]
    %v35 = vld [vmem:[#allocation2 + $0x1c] sm:$0xf]
    %v36 = vld [vmem:[#allocation2 + $0x20] sm:$0xf]
    %v37 = vld [vmem:[#allocation2 + $0x24] sm:$0xf]
    %v38 = vld [vmem:[#allocation2 + $0x28] sm:$0xf]
    %v39 = vld [vmem:[#allocation2 + $0x2c] sm:$0xf]
    %v40 = vld [vmem:[#allocation2 + $0x30] sm:$0xf]
    %v41 = vld [vmem:[#allocation2 + $0x34] sm:$0xf]
    %v42 = vld [vmem:[#allocation2 + $0x38] sm:$0xf]
    %v43 = vld [vmem:[#allocation2 + $0x3c] sm:$0xf]
    %v44 = vpack.c.bf16 %v27, %v27
    %v61 = vunpack.c.l.b16 %v28
    %v62 = vunpack.c.l.b16 %v29
    %v63 = vunpack.c.l.b16 %v30
    %v64 = vunpack.c.l.b16 %v31
    %v65 = vunpack.c.l.b16 %v32
    %v66 = vunpack.c.l.b16 %v33
    %v67 = vunpack.c.l.b16 %v34
    %v68 = vunpack.c.l.b16 %v35
    %v69 = vunpack.c.l.b16 %v36
    %v70 = vunpack.c.l.b16 %v37
    %v71 = vunpack.c.l.b16 %v38
    %v72 = vunpack.c.l.b16 %v39
    %v73 = vunpack.c.l.b16 %v40
    %v74 = vunpack.c.l.b16 %v41
    %v75 = vunpack.c.l.b16 %v42
    %v76 = vunpack.c.l.b16 %v43
    %v77 = vpack.c.b16 %v62, %v61
    %v78 = vpack.c.b16 %v64, %v63
    %v79 = vpack.c.b16 %v66, %v65
    %v80 = vpack.c.b16 %v68, %v67
    %v81 = vpack.c.b16 %v70, %v69
    %v82 = vpack.c.b16 %v72, %v71
    %v83 = vpack.c.b16 %v74, %v73
    %v84 = vpack.c.b16 %v76, %v75
    %93 = vmatpush.bf16.msra.mxu0 %v84
    %94 = vmatpush.bf16.msra.mxu0 %v83
    %95 = vmatpush.bf16.msra.mxu0 %v82
    %96 = vmatpush.bf16.msra.mxu0 %v81
    %97 = vmatpush.bf16.msra.mxu0 %v80
    %98 = vmatpush.bf16.msra.mxu0 %v79
    %99 = vmatpush.bf16.msra.mxu0 %v78
    %100 = vmatpush.bf16.msra.mxu0 %v77
    %101 = vmatmul.bf16.gmra.mxu0 %v44
    %v102 = vpop.f32.mrf.mxu0
    %v103 = vadd.f32 0.0, %v102
    %v104 = vpop.f32.mrf.mxu0
    %105 = vdwg.mxu0
    %vm106 = vcmp.gt.f32.partialorder %v103, 0.0
    %v107 = vmul.f32 %v103, 0.2
    %v108 = vsel %vm106, %v103, %v107
    %v109 = vld [vmem:[#allocation2 + $0x40] sm:$0xf]
    %v110 = vld [vmem:[#allocation2 + $0x44] sm:$0xf]
    %v111 = vld [vmem:[#allocation2 + $0x48] sm:$0xf]
    %v112 = vld [vmem:[#allocation2 + $0x4c] sm:$0xf]
    %v113 = vld [vmem:[#allocation2 + $0x50] sm:$0xf]
    %v114 = vld [vmem:[#allocation2 + $0x54] sm:$0xf]
    %v115 = vld [vmem:[#allocation2 + $0x58] sm:$0xf]
    %v116 = vld [vmem:[#allocation2 + $0x5c] sm:$0xf]
    %v117 = vld [vmem:[#allocation2 + $0x60] sm:$0xf]
    %v118 = vld [vmem:[#allocation2 + $0x64] sm:$0xf]
    %v119 = vld [vmem:[#allocation2 + $0x68] sm:$0xf]
    %v120 = vld [vmem:[#allocation2 + $0x6c] sm:$0xf]
    %v121 = vld [vmem:[#allocation2 + $0x70] sm:$0xf]
    %v122 = vld [vmem:[#allocation2 + $0x74] sm:$0xf]
    %v123 = vld [vmem:[#allocation2 + $0x78] sm:$0xf]
    %v124 = vld [vmem:[#allocation2 + $0x7c] sm:$0xf]
    %v125 = vpack.c.bf16 %v108, %v108
    %v142 = vunpack.c.l.b16 %v109
    %v143 = vunpack.c.l.b16 %v110
    %v144 = vunpack.c.l.b16 %v111
    %v145 = vunpack.c.l.b16 %v112
    %v146 = vunpack.c.l.b16 %v113
    %v147 = vunpack.c.l.b16 %v114
    %v148 = vunpack.c.l.b16 %v115
    %v149 = vunpack.c.l.b16 %v116
    %v150 = vunpack.c.l.b16 %v117
    %v151 = vunpack.c.l.b16 %v118
    %v152 = vunpack.c.l.b16 %v119
    %v153 = vunpack.c.l.b16 %v120
    %v154 = vunpack.c.l.b16 %v121
    %v155 = vunpack.c.l.b16 %v122
    %v156 = vunpack.c.l.b16 %v123
    %v157 = vunpack.c.l.b16 %v124
    %v158 = vpack.c.b16 %v143, %v142
    %v159 = vpack.c.b16 %v145, %v144
    %v160 = vpack.c.b16 %v147, %v146
    %v161 = vpack.c.b16 %v149, %v148
    %v162 = vpack.c.b16 %v151, %v150
    %v163 = vpack.c.b16 %v153, %v152
    %v164 = vpack.c.b16 %v155, %v154
    %v165 = vpack.c.b16 %v157, %v156
    %174 = vmatpush.bf16.msra.mxu0 %v165
    %175 = vmatpush.bf16.msra.mxu0 %v164
    %176 = vmatpush.bf16.msra.mxu0 %v163
    %177 = vmatpush.bf16.msra.mxu0 %v162
    %178 = vmatpush.bf16.msra.mxu0 %v161
    %179 = vmatpush.bf16.msra.mxu0 %v160
    %180 = vmatpush.bf16.msra.mxu0 %v159
    %181 = vmatpush.bf16.msra.mxu0 %v158
    %182 = vmatmul.bf16.gmra.mxu0 %v125
    %v183 = vpop.f32.mrf.mxu0
    %v184 = vadd.f32 0.0, %v183
    %v185 = vpop.f32.mrf.mxu0
    %186 = vdwg.mxu0
    %vm187 = vcmp.gt.f32.partialorder %v184, 0.0
    %v188 = vmul.f32 %v184, 0.2
    %v189 = vsel %vm187, %v184, %v188
    %v190 = vld [vmem:[#allocation2 + $0x80] sm:$0xf]
    %v191 = vld [vmem:[#allocation2 + $0x84] sm:$0xf]
    %v192 = vld [vmem:[#allocation2 + $0x88] sm:$0xf]
    %v193 = vld [vmem:[#allocation2 + $0x8c] sm:$0xf]
    %v194 = vld [vmem:[#allocation2 + $0x90] sm:$0xf]
    %v195 = vld [vmem:[#allocation2 + $0x94] sm:$0xf]
    %v196 = vld [vmem:[#allocation2 + $0x98] sm:$0xf]
    %v197 = vld [vmem:[#allocation2 + $0x9c] sm:$0xf]
    %v198 = vld [vmem:[#allocation2 + $0xa0] sm:$0xf]
    %v199 = vld [vmem:[#allocation2 + $0xa4] sm:$0xf]
    %v200 = vld [vmem:[#allocation2 + $0xa8] sm:$0xf]
    %v201 = vld [vmem:[#allocation2 + $0xac] sm:$0xf]
    %v202 = vld [vmem:[#allocation2 + $0xb0] sm:$0xf]
    %v203 = vld [vmem:[#allocation2 + $0xb4] sm:$0xf]
    %v204 = vld [vmem:[#allocation2 + $0xb8] sm:$0xf]
    %v205 = vld [vmem:[#allocation2 + $0xbc] sm:$0xf]
    %v206 = vpack.c.bf16 %v189, %v189
    %v223 = vunpack.c.l.b16 %v190
    %v224 = vunpack.c.l.b16 %v191
    %v225 = vunpack.c.l.b16 %v192
    %v226 = vunpack.c.l.b16 %v193
    %v227 = vunpack.c.l.b16 %v194
    %v228 = vunpack.c.l.b16 %v195
    %v229 = vunpack.c.l.b16 %v196
    %v230 = vunpack.c.l.b16 %v197
    %v231 = vunpack.c.l.b16 %v198
    %v232 = vunpack.c.l.b16 %v199
    %v233 = vunpack.c.l.b16 %v200
    %v234 = vunpack.c.l.b16 %v201
    %v235 = vunpack.c.l.b16 %v202
    %v236 = vunpack.c.l.b16 %v203
    %v237 = vunpack.c.l.b16 %v204
    %v238 = vunpack.c.l.b16 %v205
    %v239 = vpack.c.b16 %v224, %v223
    %v240 = vpack.c.b16 %v226, %v225
    %v241 = vpack.c.b16 %v228, %v227
    %v242 = vpack.c.b16 %v230, %v229
    %v243 = vpack.c.b16 %v232, %v231
    %v244 = vpack.c.b16 %v234, %v233
    %v245 = vpack.c.b16 %v236, %v235
    %v246 = vpack.c.b16 %v238, %v237
    %255 = vmatpush.bf16.msra.mxu0 %v246
    %256 = vmatpush.bf16.msra.mxu0 %v245
    %257 = vmatpush.bf16.msra.mxu0 %v244
    %258 = vmatpush.bf16.msra.mxu0 %v243
    %259 = vmatpush.bf16.msra.mxu0 %v242
    %260 = vmatpush.bf16.msra.mxu0 %v241
    %261 = vmatpush.bf16.msra.mxu0 %v240
    %262 = vmatpush.bf16.msra.mxu0 %v239
    %263 = vmatmul.bf16.gmra.mxu0 %v206
    %v264 = vpop.f32.mrf.mxu0
    %v265 = vadd.f32 0.0, %v264
    %v266 = vpop.f32.mrf.mxu0
    %267 = vdwg.mxu0
    %vm268 = vcmp.gt.f32.partialorder %v265, 0.0
    %v269 = vmul.f32 %v265, 0.2
    %v270 = vsel %vm268, %v265, %v269
    %v271 = vld [vmem:[#allocation2 + $0xc0] sm:$0xf]
    %v272 = vld [vmem:[#allocation2 + $0xc4] sm:$0xf]
    %v273 = vld [vmem:[#allocation2 + $0xc8] sm:$0xf]
    %v274 = vld [vmem:[#allocation2 + $0xcc] sm:$0xf]
    %v275 = vld [vmem:[#allocation2 + $0xd0] sm:$0xf]
    %v276 = vld [vmem:[#allocation2 + $0xd4] sm:$0xf]
    %v277 = vld [vmem:[#allocation2 + $0xd8] sm:$0xf]
    %v278 = vld [vmem:[#allocation2 + $0xdc] sm:$0xf]
    %v279 = vld [vmem:[#allocation2 + $0xe0] sm:$0xf]
    %v280 = vld [vmem:[#allocation2 + $0xe4] sm:$0xf]
    %v281 = vld [vmem:[#allocation2 + $0xe8] sm:$0xf]
    %v282 = vld [vmem:[#allocation2 + $0xec] sm:$0xf]
    %v283 = vld [vmem:[#allocation2 + $0xf0] sm:$0xf]
    %v284 = vld [vmem:[#allocation2 + $0xf4] sm:$0xf]
    %v285 = vld [vmem:[#allocation2 + $0xf8] sm:$0xf]
    %v286 = vld [vmem:[#allocation2 + $0xfc] sm:$0xf]
    %v287 = vpack.c.bf16 %v270, %v270
    %v304 = vunpack.c.l.b16 %v271
    %v305 = vunpack.c.l.b16 %v272
    %v306 = vunpack.c.l.b16 %v273
    %v307 = vunpack.c.l.b16 %v274
    %v308 = vunpack.c.l.b16 %v275
    %v309 = vunpack.c.l.b16 %v276
    %v310 = vunpack.c.l.b16 %v277
    %v311 = vunpack.c.l.b16 %v278
    %v312 = vunpack.c.l.b16 %v279
    %v313 = vunpack.c.l.b16 %v280
    %v314 = vunpack.c.l.b16 %v281
    %v315 = vunpack.c.l.b16 %v282
    %v316 = vunpack.c.l.b16 %v283
    %v317 = vunpack.c.l.b16 %v284
    %v318 = vunpack.c.l.b16 %v285
    %v319 = vunpack.c.l.b16 %v286
    %v320 = vpack.c.b16 %v305, %v304
    %v321 = vpack.c.b16 %v307, %v306
    %v322 = vpack.c.b16 %v309, %v308
    %v323 = vpack.c.b16 %v311, %v310
    %v324 = vpack.c.b16 %v313, %v312
    %v325 = vpack.c.b16 %v315, %v314
    %v326 = vpack.c.b16 %v317, %v316
    %v327 = vpack.c.b16 %v319, %v318
    %336 = vmatpush.bf16.msra.mxu0 %v327
    %337 = vmatpush.bf16.msra.mxu0 %v326
    %338 = vmatpush.bf16.msra.mxu0 %v325
    %339 = vmatpush.bf16.msra.mxu0 %v324
    %340 = vmatpush.bf16.msra.mxu0 %v323
    %341 = vmatpush.bf16.msra.mxu0 %v322
    %342 = vmatpush.bf16.msra.mxu0 %v321
    %343 = vmatpush.bf16.msra.mxu0 %v320
    %344 = vmatmul.bf16.gmra.mxu0 %v287
    %v345 = vpop.f32.mrf.mxu0
    %v346 = vadd.f32 0.0, %v345
    %v347 = vpop.f32.mrf.mxu0
    %348 = vdwg.mxu0
    %349 = vst [vmem:[%s2] sm:$0xff] %v346
    // Predicated region
    $region14: #{_mapping_network_jit.1} parent=1 // pred_check
      _
    $region15: #{_mapping_network_jit.1} parent=1 // pred_check_branch
      %351 = sbr.rel (0) target = $region17
    $region16: #{_mapping_network_jit.1} parent=1 // pred_region
      _
    $region17: #{_mapping_network_jit.1} parent=1 // pred_fallthru
      _
    // Predicated region
    $region18: #{_mapping_network_jit.1} parent=1 // pred_check
      _
    $region19: #{_mapping_network_jit.1} parent=1 // pred_check_branch
      %353 = sbr.rel (0) target = $region21
    $region20: #{_mapping_network_jit.1} parent=1 // pred_region
      _
    $region21: #{_mapping_network_jit.1} parent=1 // pred_fallthru
      _
    %354 = vsyncpa [#allocation3], 1

</llo_original>
